<compile_context>
chip_gen: v5e
topology: v5e:2x2
jax: 0.10.0
libtpu: 0.0.40
codegen_flags: <defaults>
</compile_context>

<pallas_src>
import functools

import numpy as np
import jax
import jax.numpy as jnp
from jax.experimental import pallas as pl
from jax.experimental.pallas import tpu as pltpu

_LANE = 128
_SUBLANE = 8


# --------------------------------------------------------------------------- #
# Kernel body
# --------------------------------------------------------------------------- #
def _transe_edge_kernel(e1_ref, e2_ref, vec_ref, out_ref, acc_ref, *, D, td, mask_tail):
    # e1_ref, e2_ref : (td, tb) input-dtype tiles (f32 or bf16) in VMEM
    # vec_ref        : (td, 1) f32 relation translation column
    # out_ref        : (1, tb) f32 output tile (revisited across the D grid axis)
    # acc_ref        : (1, tb) f32 accumulator scratch
    d = pl.program_id(2)

    @pl.when(d == 0)
    def _():
        acc_ref[...] = jnp.zeros_like(acc_ref)

    e1 = e1_ref[...].astype(jnp.float32)
    e2 = e2_ref[...].astype(jnp.float32)
    diff = (e1 + vec_ref[...]) - e2          # (td, 1) broadcasts over batch lanes
    sq = diff * diff
    if mask_tail:
        # Last D tile overhangs the embedding dim: zero the garbage rows via select
        # (select, not multiply, so Inf/NaN garbage cannot leak into the sum).
        row = jax.lax.broadcasted_iota(jnp.int32, sq.shape, 0)
        sq = jnp.where(row + d * td < D, sq, 0.0)
    # HBM-bound kernel: VPU adds + XLU sublane reduce are not the bottleneck here.
    acc_ref[...] += jnp.sum(sq, axis=0, keepdims=True)

    @pl.when(d == pl.num_programs(2) - 1)
    def _():
        out_ref[...] = -acc_ref[...]


# --------------------------------------------------------------------------- #
# Tiling / VMEM budgeting
# --------------------------------------------------------------------------- #
def _physical_vmem_bytes():
    try:
        return int(pltpu.get_tpu_info().vmem_capacity_bytes)
    except Exception:
        return 64 * 1024 * 1024              # conservative: v7x per-TensorCore VMEM


def _pick_tiles(D, B, itemsize, budget):
    """Choose (td, tb): D-tile (sublane axis) and batch-tile (lane axis).

    `budget` bounds the VMEM used by the pipelined input buffers:
      2 embeddings x 2 pipeline buffers x (td, tb) x itemsize
      + 2 buffers x (td, 128-lane-padded) x 4 bytes for the relation vector.
    """
    b_pad = pl.cdiv(B, _LANE) * _LANE
    # Preferred: keep the whole reduction axis in one tile, grow the batch tile
    # (big, lane-dense tiles amortize the ~0.35us per-grid-step overhead).
    vec_bytes = 2 * D * _LANE * 4
    avail = budget - vec_bytes
    if avail > 0:
        tb = (avail // (4 * D * itemsize)) // _LANE * _LANE
        if tb >= _LANE:
            return D, min(tb, b_pad)
    # Huge D: also tile the reduction axis (innermost "arbitrary" grid dim).
    tb = _LANE
    per_row = 2 * (2 * tb * itemsize + _LANE * 4)       # inputs + vec, double-buffered
    td = max((budget // per_row) // _SUBLANE * _SUBLANE, _SUBLANE)
    td = min(td, pl.cdiv(D, _SUBLANE) * _SUBLANE)
    for cand in range(td, _SUBLANE - 1, -_SUBLANE):     # prefer a divisor: no tail mask
        if D % cand == 0:
            return cand, tb
    return td, tb


def _vmem_limit_bytes(td, tb, itemsize, phys):
    need = (4 * td * tb * itemsize           # embeds1/2, double-buffered
            + 2 * td * _LANE * 4             # relation vector block (lane-padded), x2
            + 2 * _SUBLANE * tb * 4          # output tile (sublane-padded), x2
            + _SUBLANE * tb * 4)             # f32 accumulator scratch
    limit = max(int(need * 1.3) + (2 << 20), 32 << 20)  # never below the 32 MiB default
    return int(min(limit, max(phys - (2 << 20), 32 << 20)))


# --------------------------------------------------------------------------- #
# Wrappers
# --------------------------------------------------------------------------- #
def transe_edge_decode_stacked(embeds1, embeds2, vecs, *, batch_tile=None, d_tile=None):
    """embeds1, embeds2: [R, D, B] (f32 or bf16); vecs: [R, D, 1] f32. Returns [R, B] f32."""
    R, D, B = embeds1.shape
    assert embeds2.shape == (R, D, B)
    assert vecs.shape == (R, D, 1)
    vecs = vecs.astype(jnp.float32)

    itemsize = jnp.dtype(embeds1.dtype).itemsize
    phys = _physical_vmem_bytes()
    budget = min(int(phys * 0.45), 64 << 20)             # per-generation input budget
    td, tb = _pick_tiles(D, B, itemsize, budget)
    if batch_tile is not None:
        assert batch_tile % _LANE == 0, "batch_tile must be a multiple of 128 lanes"
        tb = batch_tile
    if d_tile is not None:
        assert d_tile == D or d_tile % _SUBLANE == 0, "d_tile must be D or a multiple of 8"
        td = d_tile
    mask_tail = (D % td) != 0

    nb = pl.cdiv(B, tb)
    nd = pl.cdiv(D, td)
    kernel = functools.partial(_transe_edge_kernel, D=D, td=td, mask_tail=mask_tail)

    out = pl.pallas_call(
        kernel,
        out_shape=jax.ShapeDtypeStruct((R, 1, B), jnp.float32),
        grid=(R, nb, nd),
        in_specs=[
            pl.BlockSpec((pl.Squeezed(), td, tb), lambda r, i, d: (r, d, i)),
            pl.BlockSpec((pl.Squeezed(), td, tb), lambda r, i, d: (r, d, i)),
            pl.BlockSpec((pl.Squeezed(), td, 1), lambda r, i, d: (r, d, 0)),
        ],
        out_specs=pl.BlockSpec((pl.Squeezed(), 1, tb), lambda r, i, d: (r, 0, i)),
        scratch_shapes=[pltpu.VMEM((1, tb), jnp.float32)],
        compiler_params=pltpu.CompilerParams(
            dimension_semantics=("parallel", "parallel", "arbitrary"),
            vmem_limit_bytes=_vmem_limit_bytes(td, tb, itemsize, phys),
        ),
    )(embeds1, embeds2, vecs)
    return out[:, 0, :]


def transe_edge_decode(embeds1, embeds2, rel_vec_col, *, batch_tile=None, d_tile=None):
    """embeds1, embeds2: [D, B]; rel_vec_col: [D, 1] f32. Returns [B] f32."""
    D, B = embeds1.shape
    assert rel_vec_col.shape == (D, 1)
    out = transe_edge_decode_stacked(embeds1[None], embeds2[None], rel_vec_col[None],
                                     batch_tile=batch_tile, d_tile=d_tile)
    return out[0]


class TransEEdgeDecoderPallas:
    """Deterministic re-implementation of the PyTorch module's parameters."""

    def __init__(self, relations, dims, key):
        self.relations = relations
        self.vecs = {}
        for r1 in relations:
            for r2 in relations[r1]:
                rel = (r1, r2[1], r2[0])
                d = dims[rel[0]]
                key, sub = jax.random.split(key)
                bound = 6.0 / np.sqrt(d)
                # init.uniform(param, a=-6/sqrt(d), b=6/sqrt(d)); stored pre-shaped as
                # an f32 (D, 1) column so the hot path has no reshape/cast.
                self.vecs[rel] = jax.random.uniform(
                    sub, (d, 1), dtype=jnp.float32, minval=-bound, maxval=bound)

    def forward(self, embeds1, embeds2, rel, *, batch_tile=None, d_tile=None):
        """Matches the PyTorch module: one relation, embeds [D, B] -> scores [B]."""
        return transe_edge_decode(embeds1, embeds2, self.vecs[rel],
                                  batch_tile=batch_tile, d_tile=d_tile)

    def forward_stacked(self, embeds1, embeds2, rels, *, batch_tile=None, d_tile=None):
        """Score R same-dim relations in one pallas_call: embeds [R, D, B] -> [R, B]."""
        vecs = jnp.stack([self.vecs[r] for r in rels], axis=0)   # (R, D, 1)
        return transe_edge_decode_stacked(embeds1, embeds2, vecs,
                                          batch_tile=batch_tile, d_tile=d_tile)


def _reference(embeds1, embeds2, vec_col):
    trans = embeds1.astype(jnp.float32) + vec_col
    return -jnp.sum((trans - embeds2.astype(jnp.float32)) ** 2, axis=0)


if __name__ == "__main__":
    key = jax.random.PRNGKey(0)

    # Small synthetic relation graph (mirrors the module's __init__ structure).
    relations = {
        "protein": [("protein", "interacts"), ("drug", "targets")],
        "drug": [("protein", "binds")],
    }
    dims = {"protein": 32, "drug": 32}

    key, k_dec = jax.random.split(key)
    decoder = TransEEdgeDecoderPallas(relations, dims, k_dec)

    # --- Case 1: tiny f32 forward (module-sized example). --------------------
    rel = ("protein", "interacts", "protein")
    D, B = dims[rel[0]], 8
    key, k1, k2 = jax.random.split(key, 3)
    embeds1 = jax.random.normal(k1, (D, B), dtype=jnp.float32)
    embeds2 = jax.random.normal(k2, (D, B), dtype=jnp.float32)
    scores = jax.block_until_ready(decoder.forward(embeds1, embeds2, rel))
    np.testing.assert_allclose(np.asarray(scores),
                               np.asarray(_reference(embeds1, embeds2, decoder.vecs[rel])),
                               rtol=1e-5, atol=1e-5)
    assert scores.shape == (B,)

    # --- Case 2: bf16 inputs, non-multiple-of-128 batch, multi batch tiles. ---
    rel2 = ("drug", "binds", "protein")
    D2, B2 = dims[rel2[0]], 300
    key, k3, k4 = jax.random.split(key, 3)
    e1b = jax.random.normal(k3, (D2, B2), dtype=jnp.float32).astype(jnp.bfloat16)
    e2b = jax.random.normal(k4, (D2, B2), dtype=jnp.float32).astype(jnp.bfloat16)
    scores2 = jax.block_until_ready(
        decoder.forward(e1b, e2b, rel2, batch_tile=128))     # forces a 3-tile batch grid
    np.testing.assert_allclose(np.asarray(scores2),
                               np.asarray(_reference(e1b, e2b, decoder.vecs[rel2])),
                               rtol=1e-5, atol=1e-4)
    assert scores2.shape == (B2,)

    # --- Case 3: exercise the large-D fallback (D grid axis + tail masking). --
    D3, B3 = 36, 200
    key, k5, k6, k7 = jax.random.split(key, 4)
    e1c = jax.random.normal(k5, (D3, B3), dtype=jnp.float32)
    e2c = jax.random.normal(k6, (D3, B3), dtype=jnp.float32)
    vec3 = jax.random.uniform(k7, (D3, 1), dtype=jnp.float32, minval=-1.0, maxval=1.0)
    scores3 = jax.block_until_ready(
        transe_edge_decode(e1c, e2c, vec3, batch_tile=128, d_tile=16))
    np.testing.assert_allclose(np.asarray(scores3),
                               np.asarray(_reference(e1c, e2c, vec3)),
                               rtol=1e-5, atol=1e-4)
    assert scores3.shape == (B3,)

    # --- Case 4: all relations scored in a single pallas_call. ----------------
    rels = [("protein", "interacts", "protein"),
            ("protein", "targets", "drug"),
            ("drug", "binds", "protein")]
    R, D4, B4 = len(rels), 32, 64
    key, k8, k9 = jax.random.split(key, 3)
    e1s = jax.random.normal(k8, (R, D4, B4), dtype=jnp.float32)
    e2s = jax.random.normal(k9, (R, D4, B4), dtype=jnp.float32)
    scores4 = jax.block_until_ready(decoder.forward_stacked(e1s, e2s, rels))
    assert scores4.shape == (R, B4)
    for ri, r in enumerate(rels):
        np.testing.assert_allclose(np.asarray(scores4[ri]),
                                   np.asarray(_reference(e1s[ri], e2s[ri], decoder.vecs[r])),
                                   rtol=1e-5, atol=1e-4)

    print("KERNEL_OK")
</pallas_src>

<mosaic_0001>
module attributes {stable_mosaic.version = 11 : i64} {
  func.func @_transe_edge_kernel(%arg0: i32, %arg1: i32, %arg2: i32, %arg3: memref<1x32x128xf32, #tpu.memory_space<vmem>>, %arg4: memref<1x32x128xf32, #tpu.memory_space<vmem>>, %arg5: memref<1x32x1xf32, #tpu.memory_space<vmem>>, %arg6: memref<1x1x128xf32, #tpu.memory_space<vmem>>, %arg7: memref<1x128xf32, #tpu.memory_space<vmem>>) attributes {dimension_semantics = [#tpu.dimension_semantics<parallel>, #tpu.dimension_semantics<parallel>, #tpu.dimension_semantics<arbitrary>], iteration_bounds = array<i64: 1, 1, 1>, scalar_prefetch = 0 : i64, scratch_operands = 1 : i64, tpu.core_type = #tpu.core_type<tc>, window_params = [{transform_indices = @transform_0, window_bounds = array<i64: 1, 32, 128>}, {transform_indices = @transform_1, window_bounds = array<i64: 1, 32, 128>}, {transform_indices = @transform_2, window_bounds = array<i64: 1, 32, 1>}, {transform_indices = @transform_3, window_bounds = array<i64: 1, 1, 128>}]} {
    %c0_i32 = arith.constant 0 : i32
    %0 = arith.cmpi eq, %arg2, %c0_i32 : i32
    %1 = arith.extui %0 : i1 to i32
    %c0_i32_0 = arith.constant 0 : i32
    %2 = arith.cmpi ne, %1, %c0_i32_0 : i32
    scf.if %2 {
      %cst_15 = arith.constant 0.000000e+00 : f32
      %21 = vector.broadcast %cst_15 : f32 to vector<1x128xf32>
      %c0_16 = arith.constant 0 : index
      %c0_17 = arith.constant 0 : index
      %22 = vector.load %arg7[%c0_16, %c0_17] : memref<1x128xf32, #tpu.memory_space<vmem>>, vector<1x128xf32>
      tpu.vector_store %arg7[%c0_16, %c0_17], %21 {strides = array<i32>} : memref<1x128xf32, #tpu.memory_space<vmem>>, vector<1x128xf32>,
    } else {
    }
    %c0 = arith.constant 0 : index
    %c0_1 = arith.constant 0 : index
    %c0_2 = arith.constant 0 : index
    %3 = vector.load %arg3[%c0, %c0_1, %c0_2] : memref<1x32x128xf32, #tpu.memory_space<vmem>>, vector<1x32x128xf32>
    %4 = vector.shape_cast %3 : vector<1x32x128xf32> to vector<32x128xf32>
    %c0_3 = arith.constant 0 : index
    %c0_4 = arith.constant 0 : index
    %c0_5 = arith.constant 0 : index
    %5 = vector.load %arg4[%c0_3, %c0_4, %c0_5] : memref<1x32x128xf32, #tpu.memory_space<vmem>>, vector<1x32x128xf32>
    %6 = vector.shape_cast %5 : vector<1x32x128xf32> to vector<32x128xf32>
    %c0_6 = arith.constant 0 : index
    %c0_7 = arith.constant 0 : index
    %c0_8 = arith.constant 0 : index
    %7 = vector.load %arg5[%c0_6, %c0_7, %c0_8] : memref<1x32x1xf32, #tpu.memory_space<vmem>>, vector<1x32x1xf32>
    %8 = vector.shape_cast %7 : vector<1x32x1xf32> to vector<32x1xf32>
    %9 = vector.broadcast %8 : vector<32x1xf32> to vector<32x128xf32>
    %10 = arith.addf %4, %9 : vector<32x128xf32>
    %11 = arith.subf %10, %6 : vector<32x128xf32>
    %12 = arith.mulf %11, %11 : vector<32x128xf32>
    %c0_9 = arith.constant 0 : index
    %c0_10 = arith.constant 0 : index
    %13 = vector.load %arg7[%c0_9, %c0_10] : memref<1x128xf32, #tpu.memory_space<vmem>>, vector<1x128xf32>
    %cst = arith.constant dense<0.000000e+00> : vector<128xf32>
    %14 = vector.multi_reduction <add>, %12, %cst [0] : vector<32x128xf32> to vector<128xf32>
    %15 = vector.shape_cast %14 : vector<128xf32> to vector<1x128xf32>
    %16 = arith.addf %13, %15 : vector<1x128xf32>
    %c0_11 = arith.constant 0 : index
    %c0_12 = arith.constant 0 : index
    %17 = vector.load %arg7[%c0_11, %c0_12] : memref<1x128xf32, #tpu.memory_space<vmem>>, vector<1x128xf32>
    tpu.vector_store %arg7[%c0_11, %c0_12], %16 {strides = array<i32>} : memref<1x128xf32, #tpu.memory_space<vmem>>, vector<1x128xf32>,
    %c0_i32_13 = arith.constant 0 : i32
    %18 = arith.cmpi eq, %arg2, %c0_i32_13 : i32
    %19 = arith.extui %18 : i1 to i32
    %c0_i32_14 = arith.constant 0 : i32
    %20 = arith.cmpi ne, %19, %c0_i32_14 : i32
    scf.if %20 {
      %c0_15 = arith.constant 0 : index
      %c0_16 = arith.constant 0 : index
      %21 = vector.load %arg7[%c0_15, %c0_16] : memref<1x128xf32, #tpu.memory_space<vmem>>, vector<1x128xf32>
      %cst_17 = arith.constant 0.000000e+00 : f32
      %22 = vector.broadcast %cst_17 : f32 to vector<1x128xf32>
      %23 = arith.subf %22, %21 : vector<1x128xf32>
      %c0_18 = arith.constant 0 : index
      %c0_19 = arith.constant 0 : index
      %c0_20 = arith.constant 0 : index
      %24 = vector.load %arg6[%c0_18, %c0_19, %c0_20] : memref<1x1x128xf32, #tpu.memory_space<vmem>>, vector<1x1x128xf32>
      %25 = vector.shape_cast %24 : vector<1x1x128xf32> to vector<1x128xf32>
      %26 = vector.shape_cast %23 : vector<1x128xf32> to vector<1x1x128xf32>
      tpu.vector_store %arg6[%c0_18, %c0_19, %c0_20], %26 {strides = array<i32>} : memref<1x1x128xf32, #tpu.memory_space<vmem>>, vector<1x1x128xf32>,
    } else {
    }
    return
  }
  func.func @transform_0(%arg0: i32, %arg1: i32, %arg2: i32) -> (i32, i32, i32) {
    %c0_i32 = arith.constant 0 : i32
    return %arg0, %arg2, %arg1 : i32, i32, i32
  }
  func.func @transform_1(%arg0: i32, %arg1: i32, %arg2: i32) -> (i32, i32, i32) {
    %c0_i32 = arith.constant 0 : i32
    return %arg0, %arg2, %arg1 : i32, i32, i32
  }
  func.func @transform_2(%arg0: i32, %arg1: i32, %arg2: i32) -> (i32, i32, i32) {
    %c0_i32 = arith.constant 0 : i32
    %c0_i32_0 = arith.constant 0 : i32
    return %arg0, %arg2, %c0_i32 : i32, i32, i32
  }
  func.func @transform_3(%arg0: i32, %arg1: i32, %arg2: i32) -> (i32, i32, i32) {
    %c0_i32 = arith.constant 0 : i32
    %c0_i32_0 = arith.constant 0 : i32
    return %arg0, %c0_i32, %arg1 : i32, i32, i32
  }
}

</mosaic_0001>

<llo_original>
// kernel: tpu_custom_call.1
$region0: #{tpu_custom_call.1}
  #allocation0 [shape = 'u32[]', space=smem, size = 0x4, offset = 0x4, fixed_abs, tag = 'smem constant byte address 0x4 - core index']
  #allocation1 [shape = 'u32[72,128]{1,0:T(1,128)}', space=vmem, size = 0x9000, scoped, tag = 'internal scratch']
  #allocation2 [shape = 'f32[1,128]{1,0:T(1,128)}', space=vmem, size = 0x200, scoped, tag = 'scratch operand']
  %s0 = inlined_call_operand.vmem [shape: f32[1,32,8], index: 0, kind: input, shape index: {}]
  %s1 = inlined_call_operand.vmem [shape: f32[1,32,8], index: 1, kind: input, shape index: {}]
  %s2 = inlined_call_operand.vmem [shape: f32[1,32,1], index: 2, kind: input, shape index: {}]
  %s3 = inlined_call_operand.hbm [shape: f32[1,1,8], index: 3, kind: output, shape index: {}]
  %s4 = sld [smem:[#allocation0]]
  $region30: #{tpu_custom_call.1} parent=0
    _
  %s6 = ssub.s32 1, %s4
  %s7 = scalar_select 0, %s6, %s4
  $region1: #{tpu_custom_call.1} parent=0
    #allocation3 [shape = 'u8[512]{0}', space=vmem, size = 0x400, scoped, tag = 'output window, operand 0, single buffered']
    #allocation4 [shape = 's32[1]{0}', space=sflag, size = 0x4, scoped, tag = 'scoped memory for tpu_custom_call.1']
    %8 = vsyncpa [#allocation4], 0
    // Predicated region
    $region2: #{tpu_custom_call.1} parent=1 // pred_check
      _
    $region3: #{tpu_custom_call.1} parent=1 // pred_check_branch
      %10 = sbr.rel (0) target = $region5
    $region4: #{tpu_custom_call.1} parent=1 // pred_region
      _
    $region5: #{tpu_custom_call.1} parent=1 // pred_fallthru
      _
    // Predicated region
    $region6: #{tpu_custom_call.1} parent=1 // pred_check
      _
    $region7: #{tpu_custom_call.1} parent=1 // pred_check_branch
      %12 = sbr.rel (0) target = $region9
    $region8: #{tpu_custom_call.1} parent=1 // pred_region
      _
    $region9: #{tpu_custom_call.1} parent=1 // pred_fallthru
      _
    // Predicated region
    $region10: #{tpu_custom_call.1} parent=1 // pred_check
      _
    $region11: #{tpu_custom_call.1} parent=1 // pred_check_branch
      %14 = sbr.rel (0) target = $region13
    $region12: #{tpu_custom_call.1} parent=1 // pred_region
      _
    $region13: #{tpu_custom_call.1} parent=1 // pred_fallthru
      _
    %p15 = scmp.eq.s32.totalorder 0, 0
    // Predicated region
    $region14: #{tpu_custom_call.1} parent=1 // pred_check
      %p16 = pneg %p15
    $region15: #{tpu_custom_call.1} parent=1 // pred_check_branch
      %18 = sbr.rel (%p16) target = $region17
    $region16: #{tpu_custom_call.1} parent=1 // pred_region
      %19 = vst [vmem:[#allocation2] sm:$0x1] 0.0
    $region17: #{tpu_custom_call.1} parent=1 // pred_fallthru
      _
    %v20 = vld [vmem:[%s0] sm:$0xff]
    %v21 = vld [vmem:[%s0 + $0x8] sm:$0xff]
    %v22 = vld [vmem:[%s0 + $0x10] sm:$0xff]
    %v23 = vld [vmem:[%s0 + $0x18] sm:$0xff]
    %v24 = vld [vmem:[%s1] sm:$0xff]
    %v25 = vld [vmem:[%s1 + $0x8] sm:$0xff]
    %v26 = vld [vmem:[%s1 + $0x10] sm:$0xff]
    %v27 = vld [vmem:[%s1 + $0x18] sm:$0xff]
    %v28 = vld [vmem:[%s2] sm:$0xff]
    %v29 = vld [vmem:[%s2 + $0x8] sm:$0xff]
    %v30 = vld [vmem:[%s2 + $0x10] sm:$0xff]
    %v31 = vld [vmem:[%s2 + $0x18] sm:$0xff]
    %33 = vset.pattern.permute.xlu0 0
    %34 = vperm.xlu0 %33, %v28
    %v35 = vpop.permute.xlu0 %34
    %38 = vset.pattern.permute.xlu0 0
    %39 = vperm.xlu0 %38, %v29
    %v40 = vpop.permute.xlu0 %39
    %43 = vset.pattern.permute.xlu0 0
    %44 = vperm.xlu0 %43, %v30
    %v45 = vpop.permute.xlu0 %44
    %48 = vset.pattern.permute.xlu0 0
    %49 = vperm.xlu0 %48, %v31
    %v50 = vpop.permute.xlu0 %49
    %v52 = vadd.f32 %v20, %v35
    %v53 = vadd.f32 %v21, %v40
    %v54 = vadd.f32 %v22, %v45
    %v55 = vadd.f32 %v23, %v50
    %v56 = vsub.f32 %v52, %v24
    %v57 = vsub.f32 %v53, %v25
    %v58 = vsub.f32 %v54, %v26
    %v59 = vsub.f32 %v55, %v27
    %v60 = vmul.f32 %v56, %v56
    %v61 = vmul.f32 %v57, %v57
    %v62 = vmul.f32 %v58, %v58
    %v63 = vmul.f32 %v59, %v59
    %v64 = vld [vmem:[#allocation2] sm:$0x1]
    %v65 = vadd.f32 %v60, %v61
    %v66 = vadd.f32 %v65, %v62
    %v67 = vadd.f32 %v66, %v63
    %v68 = vrot.slane %v67, 4
    %v69 = vadd.f32 %v67, %v68
    %v70 = vrot.slane %v69, 2
    %v71 = vadd.f32 %v69, %v70
    %v72 = vrot.slane %v71, 1
    %v73 = vadd.f32 %v71, %v72
    %v74 = vadd.f32 %v64, %v73
    %75 = vst [vmem:[#allocation2] sm:$0x1] %v74
    // Predicated region
    $region18: #{tpu_custom_call.1} parent=1 // pred_check
      %p76 = pneg %p15
    $region19: #{tpu_custom_call.1} parent=1 // pred_check_branch
      %78 = sbr.rel (%p76) target = $region21
    $region20: #{tpu_custom_call.1} parent=1 // pred_region
      %v79 = vld [vmem:[#allocation2] sm:$0x1]
      %v80 = vsub.f32 0.0, %v79
      %81 = vst [vmem:[#allocation3] sm:$0x1] %v80
    $region21: #{tpu_custom_call.1} parent=1 // pred_fallthru
      _
    // Predicated region
    $region22: #{tpu_custom_call.1} parent=1 // pred_check
      _
    $region23: #{tpu_custom_call.1} parent=1 // pred_check_branch
      %83 = sbr.rel (0) target = $region25
    $region24: #{tpu_custom_call.1} parent=1 // pred_region
      %85 = vsyncadd [#allocation4], 0
      %s87 = sshll.u32 [#allocation3], 4
      %s88 = int_to_ptr.vmem [resolvable:$true] %s87
      %s89 = sshll.u32 %s3, 4
      %s90 = int_to_ptr.hbm [resolvable:$true] %s89
      %92 = dma.vmem_to_hbm [thread:$0]  %s88, 16, %s90, [#allocation4]
    $region25: #{tpu_custom_call.1} parent=1 // pred_fallthru
      _
    // Predicated region
    $region26: #{tpu_custom_call.1} parent=1 // pred_check
      _
    $region27: #{tpu_custom_call.1} parent=1 // pred_check_branch
      %94 = sbr.rel (0) target = $region29
    $region28: #{tpu_custom_call.1} parent=1 // pred_region
      %96 = dma.done [#allocation4], 16
    $region29: #{tpu_custom_call.1} parent=1 // pred_fallthru
      _
    %97 = vsyncpa [#allocation4], 1

</llo_original>
